<compile_context>
chip_gen: v7x
topology: tpu7x:2x2x1
jax: 0.10.0
libtpu: 0.0.40
codegen_flags: <defaults>
</compile_context>

<pallas_src>
import functools

import jax
import jax.numpy as jnp
from jax import lax
from jax.experimental import pallas as pl
from jax.experimental.pallas import tpu as pltpu


def _round_up(x, m):
    return ((x + m - 1) // m) * m


def _pick_tile(base, target, gran):
    """Largest multiple of `gran` <= min(target, base) that divides `base`.

    `base` must be a multiple of `gran`, so this always returns a valid tile
    and the tiled dim needs no padding beyond the lane/sublane rounding
    already applied to `base`."""
    t = max(gran, (min(target, base) // gran) * gran)
    while base % t:
        t -= gran
    return t


def _vmem_limit_bytes():
    # Generation-aware scoped-VMEM budget: v4/v5e/v6e have 128 MiB physical
    # VMEM (raise well past the 16/32 MiB scoped default); v7x has only
    # 64 MiB, so stay conservative there (also the unknown-device default).
    try:
        kind = jax.devices()[0].device_kind.lower()
    except Exception:
        kind = ""
    if ("v4" in kind) or ("v5" in kind) or ("v6" in kind):
        return 96 * 1024 * 1024
    return 48 * 1024 * 1024


# ----------------------------- kernels ------------------------------------


def _linear_kernel_single(x_ref, w_ref, b_ref, o_ref, *, use_act):
    # Grid-less single-block path for tiny layers: whole arrays in VMEM,
    # no padding, one MXU call.
    out = lax.dot_general(
        x_ref[...], w_ref[...],
        dimension_numbers=(((1,), (1,)), ((), ())),  # contract over in_feats
        preferred_element_type=jnp.float32)
    out = out + b_ref[...].astype(jnp.float32)       # (1, out_feats) broadcasts
    if use_act:
        out = jnp.maximum(out, 0.0)
    o_ref[...] = out.astype(o_ref.dtype)


def _linear_kernel_acc_in_out(x_ref, w_ref, b_ref, o_ref, *, use_act):
    # f32 output: accumulate directly into the VMEM-resident output block
    # (same (i, j) block across all K steps) -> no scratch accumulator.
    k = pl.program_id(2)

    @pl.when(k == 0)
    def _init():
        o_ref[...] = jnp.zeros_like(o_ref)

    # x tile: (tm, tk); W tile: (tn, tk) in PyTorch [out, in] layout.
    # Contract over the shared in_feats axis -> no wrapper-side transpose.
    o_ref[...] += lax.dot_general(
        x_ref[...], w_ref[...],
        dimension_numbers=(((1,), (1,)), ((), ())),
        preferred_element_type=jnp.float32)

    @pl.when(k == pl.num_programs(2) - 1)
    def _finalize():
        out = o_ref[...] + b_ref[...]                # bias is f32, (1, tn)
        if use_act:
            out = jnp.maximum(out, 0.0)
        o_ref[...] = out


def _linear_kernel_scratch(x_ref, w_ref, b_ref, o_ref, acc_ref, *, use_act):
    # Low-precision output: keep an f32 VMEM scratch accumulator.
    k = pl.program_id(2)

    @pl.when(k == 0)
    def _init():
        acc_ref[...] = jnp.zeros_like(acc_ref)

    acc_ref[...] += lax.dot_general(
        x_ref[...], w_ref[...],
        dimension_numbers=(((1,), (1,)), ((), ())),
        preferred_element_type=jnp.float32)

    @pl.when(k == pl.num_programs(2) - 1)
    def _finalize():
        out = acc_ref[...] + b_ref[...].astype(jnp.float32)
        if use_act:
            out = jnp.maximum(out, 0.0)
        o_ref[...] = out.astype(o_ref.dtype)


# ----------------------------- wrapper -------------------------------------


def linear_layer(x, weight, bias, *, use_act=True, compute_dtype=jnp.bfloat16,
                 tm=512, tn=512, tk=1024, force_tiled=False):
    """Pallas equivalent of LinearLayer.forward.

    x:      [batch, in_feats]
    weight: [out_feats, in_feats]  (PyTorch nn.Linear convention)
    bias:   [out_feats]
    returns [batch, out_feats] in x's original dtype.
    """
    batch, in_feats = x.shape
    out_feats, in_feats_w = weight.shape
    assert in_feats == in_feats_w, "weight/in_feats mismatch"

    out_dtype = x.dtype
    if compute_dtype is not None:
        # bf16 inputs + f32 accumulation (MXU-native path); bias stays f32.
        if x.dtype != compute_dtype:
            x = x.astype(compute_dtype)
        if weight.dtype != compute_dtype:
            weight = weight.astype(compute_dtype)
    bias = bias.astype(jnp.float32)

    vmem_limit = _vmem_limit_bytes()

    # ---- tiny-problem fast path: single block, no grid, no padding --------
    footprint = (x.size * x.dtype.itemsize
                 + weight.size * weight.dtype.itemsize
                 + batch * out_feats * 4 + out_feats * 4)
    if (not force_tiled and batch <= 512 and out_feats <= 512
            and in_feats <= 2048 and footprint <= (4 << 20)):
        return pl.pallas_call(
            functools.partial(_linear_kernel_single, use_act=use_act),
            out_shape=jax.ShapeDtypeStruct((batch, out_feats), out_dtype),
            compiler_params=pltpu.CompilerParams(vmem_limit_bytes=vmem_limit),
        )(x, weight, bias.reshape(1, out_feats))

    # ---- tiled (M, N, K) path ---------------------------------------------
    m_base = _round_up(batch, 8)
    n_base = _round_up(out_feats, 128)
    k_base = _round_up(in_feats, 128)

    tm = _pick_tile(m_base, tm, 8)
    n_gran = 256 if n_base % 256 == 0 else 128   # feed the 2x256x256 MXU fully
    tn = _pick_tile(n_base, tn, n_gran)
    tk = _pick_tile(k_base, tk, 128)

    # Ensure >= 2 blocks across the "parallel" (M, N) axes so both v7x
    # TensorCores get work even for single-tile problems.
    if (m_base // tm) * (n_base // tn) == 1:
        if tm % 16 == 0:
            tm //= 2
        elif tn % 256 == 0:
            tn //= 2

    # Padding only for the unavoidable 8/128 rounding of raw dims; tiles
    # always divide the rounded dims, so there is no tile-induced padding.
    if (m_base, k_base) != (batch, in_feats):
        x = jnp.pad(x, ((0, m_base - batch), (0, k_base - in_feats)))
    if (n_base, k_base) != (out_feats, in_feats):
        weight = jnp.pad(weight, ((0, n_base - out_feats), (0, k_base - in_feats)))
    b2d = jnp.pad(bias, (0, n_base - out_feats)).reshape(1, n_base)

    grid = (m_base // tm, n_base // tn, k_base // tk)

    acc_in_out = (out_dtype == jnp.float32)
    if acc_in_out:
        kernel = functools.partial(_linear_kernel_acc_in_out, use_act=use_act)
        scratch_shapes = []
    else:
        kernel = functools.partial(_linear_kernel_scratch, use_act=use_act)
        scratch_shapes = [pltpu.VMEM((tm, tn), jnp.float32)]

    flops = 2 * m_base * n_base * k_base
    bytes_accessed = int(
        x.size * x.dtype.itemsize
        + weight.size * weight.dtype.itemsize
        + b2d.size * 4
        + m_base * n_base * jnp.dtype(out_dtype).itemsize)

    out = pl.pallas_call(
        kernel,
        out_shape=jax.ShapeDtypeStruct((m_base, n_base), out_dtype),
        grid_spec=pltpu.PrefetchScalarGridSpec(
            num_scalar_prefetch=0,
            grid=grid,
            in_specs=[
                pl.BlockSpec((tm, tk), lambda i, j, k: (i, k)),   # x
                pl.BlockSpec((tn, tk), lambda i, j, k: (j, k)),   # W [out, in]
                pl.BlockSpec((1, tn), lambda i, j, k: (0, j)),    # bias
            ],
            out_specs=pl.BlockSpec((tm, tn), lambda i, j, k: (i, j)),
            scratch_shapes=scratch_shapes,
        ),
        compiler_params=pltpu.CompilerParams(
            dimension_semantics=("parallel", "parallel", "arbitrary"),
            vmem_limit_bytes=vmem_limit,
        ),
        cost_estimate=pl.CostEstimate(
            flops=flops, transcendentals=0, bytes_accessed=bytes_accessed),
    )(x, weight, b2d)

    return out[:batch, :out_feats]


def init_linear_params(key, in_feats, out_feats):
    # Deterministic init mirroring nn.Linear defaults:
    # U(-1/sqrt(in_feats), 1/sqrt(in_feats)) for both weight and bias.
    k_w, k_b = jax.random.split(key)
    bound = 1.0 / jnp.sqrt(jnp.float32(in_feats))
    weight = jax.random.uniform(
        k_w, (out_feats, in_feats), jnp.float32, -bound, bound)
    bias = jax.random.uniform(k_b, (out_feats,), jnp.float32, -bound, bound)
    return weight, bias


if __name__ == "__main__":
    key = jax.random.PRNGKey(0)
    k_x, k_p, k_x2, k_p2, k_x3, k_p3 = jax.random.split(key, 6)

    def ref_linear(x, w, b, use_act, compute_dtype=jnp.bfloat16):
        # f32 reference on the same (bf16-cast) inputs the kernel consumes,
        # so only accumulation-order differences remain.
        if compute_dtype is not None:
            x = x.astype(compute_dtype).astype(jnp.float32)
            w = w.astype(compute_dtype).astype(jnp.float32)
        y = x @ w.T + b
        return jnp.maximum(y, 0.0) if use_act else y

    # 1) Tiny iris/MNIST-style layer -> grid-less single-block path, ReLU on.
    batch, in_feats, out_feats = 8, 32, 16
    x = jax.random.normal(k_x, (batch, in_feats), jnp.float32)
    w, b = init_linear_params(k_p, in_feats, out_feats)
    out = jax.block_until_ready(linear_layer(x, w, b, use_act=True))
    assert out.shape == (batch, out_feats) and out.dtype == jnp.float32
    assert jnp.allclose(out, ref_linear(x, w, b, True), atol=1e-3, rtol=1e-3)

    # 2) Non-lane-aligned dims, no ReLU -> still single-block path, no padding.
    b2_, i2, o2 = 16, 640, 160
    x2 = jax.random.normal(k_x2, (b2_, i2), jnp.float32)
    w2, bi2 = init_linear_params(k_p2, i2, o2)
    out2 = jax.block_until_ready(linear_layer(x2, w2, bi2, use_act=False))
    assert jnp.allclose(out2, ref_linear(x2, w2, bi2, False),
                        atol=2e-3, rtol=2e-3)

    # 3) Force the tiled (M, N, K) grid path: multi-step K reduction,
    #    acc-in-f32-output variant, megacore tile split.
    b3_, i3, o3 = 256, 1280, 384
    x3 = jax.random.normal(k_x3, (b3_, i3), jnp.float32)
    w3, bi3 = init_linear_params(k_p3, i3, o3)
    out3 = jax.block_until_ready(
        linear_layer(x3, w3, bi3, use_act=True, force_tiled=True))
    assert out3.shape == (b3_, o3)
    assert jnp.allclose(out3, ref_linear(x3, w3, bi3, True),
                        atol=5e-3, rtol=5e-3)

    # 4) bf16 output -> f32 scratch-accumulator variant on the tiled path.
    out4 = jax.block_until_ready(
        linear_layer(x3.astype(jnp.bfloat16), w3.astype(jnp.bfloat16), bi3,
                     use_act=True, compute_dtype=None, force_tiled=True))
    assert out4.dtype == jnp.bfloat16
    assert jnp.allclose(out4.astype(jnp.float32), ref_linear(x3, w3, bi3, True),
                        atol=3e-2, rtol=3e-2)

    print("KERNEL_OK")
</pallas_src>

<mosaic_0001>
module attributes {stable_mosaic.version = 11 : i64} {
  func.func @_linear_kernel_single(%arg0: memref<8x32xbf16, #tpu.memory_space<vmem>>, %arg1: memref<16x32xbf16, #tpu.memory_space<vmem>>, %arg2: memref<1x16xf32, #tpu.memory_space<vmem>>, %arg3: memref<8x16xf32, #tpu.memory_space<vmem>>) attributes {dimension_semantics = [], scalar_prefetch = 0 : i64, scratch_operands = 0 : i64, tpu.core_type = #tpu.core_type<tc>} {
    %c0 = arith.constant 0 : index
    %c0_0 = arith.constant 0 : index
    %0 = vector.load %arg0[%c0, %c0_0] : memref<8x32xbf16, #tpu.memory_space<vmem>>, vector<8x32xbf16>
    %c0_1 = arith.constant 0 : index
    %c0_2 = arith.constant 0 : index
    %1 = vector.load %arg1[%c0_1, %c0_2] : memref<16x32xbf16, #tpu.memory_space<vmem>>, vector<16x32xbf16>
    %cst = arith.constant dense<0.000000e+00> : vector<8x16xf32>
    %2 = tpu.matmul %0, %1, %cst {dimension_numbers = #tpu.dot_dimension_numbers<[1], [1], [0], [0], [0, 0, 1, 0], [], []>} : vector<8x32xbf16>, vector<16x32xbf16>, vector<8x16xf32> -> vector<8x16xf32>
    %c0_3 = arith.constant 0 : index
    %c0_4 = arith.constant 0 : index
    %3 = vector.load %arg2[%c0_3, %c0_4] : memref<1x16xf32, #tpu.memory_space<vmem>>, vector<1x16xf32>
    %4 = vector.broadcast %3 : vector<1x16xf32> to vector<8x16xf32>
    %5 = arith.addf %2, %4 : vector<8x16xf32>
    %cst_5 = arith.constant 0.000000e+00 : f32
    %6 = vector.broadcast %cst_5 : f32 to vector<8x16xf32>
    %7 = arith.maximumf %5, %6 : vector<8x16xf32>
    %c0_6 = arith.constant 0 : index
    %c0_7 = arith.constant 0 : index
    %8 = vector.load %arg3[%c0_6, %c0_7] : memref<8x16xf32, #tpu.memory_space<vmem>>, vector<8x16xf32>
    tpu.vector_store %arg3[%c0_6, %c0_7], %7 {strides = array<i32>} : memref<8x16xf32, #tpu.memory_space<vmem>>, vector<8x16xf32>,
    return
  }
}

</mosaic_0001>

<llo_original>
// kernel: tpu_custom_call.1
$region0: #{tpu_custom_call.1}
  #allocation0 [shape = 'u32[]', space=smem, size = 0x4, offset = 0x4, fixed_abs, tag = 'smem constant byte address 0x4 - core index']
  #allocation1 [shape = 'u32[144,128]{1,0:T(1,128)}', space=vmem, size = 0x12000, scoped, tag = 'internal scratch']
  %s0 = inlined_call_operand.hbm [shape: bf16[8,32], index: 0, kind: input, shape index: {}]
  %s1 = inlined_call_operand.hbm [shape: bf16[16,32], index: 1, kind: input, shape index: {}]
  %s2 = inlined_call_operand.vmem [shape: f32[1,16], index: 2, kind: input, shape index: {}]
  %s3 = inlined_call_operand.hbm [shape: f32[8,16], index: 3, kind: output, shape index: {}]
  %s4 = sld [smem:[#allocation0]]
  $region30: #{tpu_custom_call.1} parent=0
    _
  %s6 = ssub.s32 1, %s4
  %s7 = scalar_select 0, %s6, %s4
  $region1: #{tpu_custom_call.1} parent=0
    #allocation2 [shape = 'u8[2048]{0}', space=vmem, size = 0x800, scoped, tag = 'input window, operand 0, single buffered']
    #allocation3 [shape = 's32[1]{0}', space=sflag, size = 0x4, scoped, tag = 'scoped memory for tpu_custom_call.1']
    #allocation4 [shape = 's32[1]{0}', space=sflag, size = 0x4, scoped, tag = 'scoped memory for tpu_custom_call.1']
    #allocation5 [shape = 'u8[4096]{0}', space=vmem, size = 0x1000, scoped, tag = 'input window, operand 1, single buffered']
    #allocation6 [shape = 's32[1]{0}', space=sflag, size = 0x4, scoped, tag = 'scoped memory for tpu_custom_call.1']
    #allocation7 [shape = 'u8[4096]{0}', space=vmem, size = 0x1000, scoped, tag = 'output window, operand 0, single buffered']
    %8 = vsyncpa [#allocation3], 0
    %9 = vsyncpa [#allocation6], 0
    %10 = vsyncpa [#allocation4], 0
    // Predicated region
    $region2: #{tpu_custom_call.1} parent=1 // pred_check
      _
    $region3: #{tpu_custom_call.1} parent=1 // pred_check_branch
      %12 = sbr.rel (0) target = $region5
    $region4: #{tpu_custom_call.1} parent=1 // pred_region
      %s14 = ssub.s32 64, 64
      %15 = vsyncadd [#allocation3], %s14
      %s17 = sshll.u32 [#allocation2], 4
      %s18 = int_to_ptr.vmem [resolvable:$true] %s17
      %20 = dma.hbm_to_vmem [thread:$0]  %s0, 64, %s18, [#allocation3]
    $region5: #{tpu_custom_call.1} parent=1 // pred_fallthru
      _
    // Predicated region
    $region6: #{tpu_custom_call.1} parent=1 // pred_check
      _
    $region7: #{tpu_custom_call.1} parent=1 // pred_check_branch
      %22 = sbr.rel (0) target = $region9
    $region8: #{tpu_custom_call.1} parent=1 // pred_region
      %s24 = ssub.s32 128, 128
      %25 = vsyncadd [#allocation6], %s24
      %s26 = sshll.u32 [#allocation5], 4
      %s27 = int_to_ptr.vmem [resolvable:$true] %s26
      %32 = dma.hbm_to_vmem [thread:$0]  %s1, 128, %s27, [#allocation6], 64, 64, 4
    $region9: #{tpu_custom_call.1} parent=1 // pred_fallthru
      _
    // Predicated region
    $region10: #{tpu_custom_call.1} parent=1 // pred_check
      _
    $region11: #{tpu_custom_call.1} parent=1 // pred_check_branch
      %34 = sbr.rel (0) target = $region13
    $region12: #{tpu_custom_call.1} parent=1 // pred_region
      _
    $region13: #{tpu_custom_call.1} parent=1 // pred_fallthru
      _
    // Predicated region
    $region14: #{tpu_custom_call.1} parent=1 // pred_check
      _
    $region15: #{tpu_custom_call.1} parent=1 // pred_check_branch
      %36 = sbr.rel (0) target = $region17
    $region16: #{tpu_custom_call.1} parent=1 // pred_region
      %37 = dma.done [#allocation3], 64
    $region17: #{tpu_custom_call.1} parent=1 // pred_fallthru
      _
    // Predicated region
    $region18: #{tpu_custom_call.1} parent=1 // pred_check
      _
    $region19: #{tpu_custom_call.1} parent=1 // pred_check_branch
      %39 = sbr.rel (0) target = $region21
    $region20: #{tpu_custom_call.1} parent=1 // pred_region
      %40 = dma.done [#allocation6], 128
    $region21: #{tpu_custom_call.1} parent=1 // pred_fallthru
      _
    %v42 = vld [vmem:[#allocation2] sm:$0xf]
    %v43 = vld [vmem:[#allocation5] sm:$0xf]
    %v44 = vld [vmem:[#allocation5 + $0x4] sm:$0xf]
    %v45 = vld [vmem:[%s2] sm:$0x1]
    %v47 = vlaneseq
    %v48 = vshrl.u32 %v47, 7
    %v49 = vsub.s32 0, %v48
    %v50 = vrot.slane %v45, %v49
    %v54 = vunpack.c.l.b16 %v43
    %v55 = vunpack.c.l.b16 %v44
    %v56 = vpack.c.b16 %v55, %v54
    %vm57 = vcmask 261120
    %v59 = vsel %vm57, %v42, 0
    %v62 = vsel %vm57, %v56, 0
    %64 = vmatprep.subr.bf16.mxu0 0
    %65 = vmatpush1.bf16.xpose.msra.mxu0 %v62
    %66 = vmatprep.subr.bf16.mxu0 0
    %67 = vmatpush1.bf16.xpose.msra.mxu0 0
    %68 = vmatprep.subr.bf16.mxu0 0
    %69 = vmatpush1.bf16.xpose.msra.mxu0 0
    %70 = vmatprep.subr.bf16.mxu0 0
    %71 = vmatpush1.bf16.xpose.msra.mxu0 0
    %72 = vmatprep.subr.bf16.mxu0 0
    %73 = vmatpush1.bf16.xpose.msra.mxu0 0
    %74 = vmatprep.subr.bf16.mxu0 0
    %75 = vmatpush1.bf16.xpose.msra.mxu0 0
    %76 = vmatprep.subr.bf16.mxu0 0
    %77 = vmatpush1.bf16.xpose.msra.mxu0 0
    %78 = vmatprep.subr.bf16.mxu0 0
    %79 = vmatpush1.bf16.xpose.msra.mxu0 0
    %80 = vmatprep.subr.bf16.mxu0 0
    %81 = vmatpush1.bf16.xpose.msra.mxu0 0
    %82 = vmatprep.subr.bf16.mxu0 0
    %83 = vmatpush1.bf16.xpose.msra.mxu0 0
    %84 = vmatprep.subr.bf16.mxu0 0
    %85 = vmatpush1.bf16.xpose.msra.mxu0 0
    %86 = vmatprep.subr.bf16.mxu0 0
    %87 = vmatpush1.bf16.xpose.msra.mxu0 0
    %88 = vmatprep.subr.bf16.mxu0 0
    %89 = vmatpush1.bf16.xpose.msra.mxu0 0
    %90 = vmatprep.subr.bf16.mxu0 0
    %91 = vmatpush1.bf16.xpose.msra.mxu0 0
    %92 = vmatprep.subr.bf16.mxu0 0
    %93 = vmatpush1.bf16.xpose.msra.mxu0 0
    %94 = vmatprep.subr.bf16.mxu0 0
    %95 = vmatpush1.bf16.xpose.msra.mxu0 0
    %96 = vmatprep.mubr.bf16.mxu0 0
    %97 = vmatmul.mubr.bf16.gmra.mrb[0].mxu0 %v59
    %v98 = vpop.f32.mrb[0].mxu0
    %v99 = vadd.f32 %v50, %v98
    %v100 = vpop.f32.mrb[0].mxu0
    %v101 = vpop.f32.mrb[0].mxu0
    %v102 = vpop.f32.mrb[0].mxu0
    %103 = vdwg.mxu0
    %v104 = vmax.f32 %v99, 0.0
    %vm105 = vcmask 130048
    %106 = vst.msk [vmem:[#allocation7] sm:$0xff] %vm105, %v104
    // Predicated region
    $region22: #{tpu_custom_call.1} parent=1 // pred_check
      _
    $region23: #{tpu_custom_call.1} parent=1 // pred_check_branch
      %108 = sbr.rel (0) target = $region25
    $region24: #{tpu_custom_call.1} parent=1 // pred_region
      %s110 = ssub.s32 128, 128
      %111 = vsyncadd [#allocation4], %s110
      %s113 = sshll.u32 [#allocation7], 4
      %s114 = int_to_ptr.vmem [resolvable:$true] %s113
      %116 = dma.vmem_to_hbm [thread:$0]  %s114, 128, %s3, [#allocation4]
    $region25: #{tpu_custom_call.1} parent=1 // pred_fallthru
      _
    // Predicated region
    $region26: #{tpu_custom_call.1} parent=1 // pred_check
      _
    $region27: #{tpu_custom_call.1} parent=1 // pred_check_branch
      %118 = sbr.rel (0) target = $region29
    $region28: #{tpu_custom_call.1} parent=1 // pred_region
      %119 = dma.done [#allocation4], 128
    $region29: #{tpu_custom_call.1} parent=1 // pred_fallthru
      _
    %120 = vsyncpa [#allocation3], 1
    %121 = vsyncpa [#allocation6], 1
    %122 = vsyncpa [#allocation4], 1

</llo_original>
